<compile_context>
chip_gen: v7x
topology: tpu7x:2x2x1
jax: 0.10.0
libtpu: 0.0.40
codegen_flags: <defaults>
</compile_context>

<pallas_src>
import jax
import jax.numpy as jnp
from jax.experimental import pallas as pl
from jax.experimental.pallas import tpu as pltpu

# ----- true model dims (from the PyTorch module) -----
IN_F = 2
HID = 16
OUT_F = 2

# ----- kernel tiling parameters -----
HPAD = 128        # hidden 16 -> 128 lanes (VMEM-only, natural MXU/lane layout)
SUBLANE = 8
MIN_TILE = 1024   # smallest tile once the batch is split (keeps steps chunky)
MAX_TILE = 8192   # ~9 MiB VMEM footprint at f32; fits the 32 MiB scoped cap


def _round_up(n, m):
    return ((n + m - 1) // m) * m


def _choose_tile(batch):
    """Rows per grid step (batch is a static Python int at trace time)."""
    rounded = _round_up(max(batch, 1), SUBLANE)
    if rounded <= 2 * MIN_TILE:
        return rounded                                  # single grid step
    target = _round_up(-(-rounded // 8), SUBLANE)       # ~8 steps (v7x megacore)
    return max(MIN_TILE, min(MAX_TILE, target))


def _mlp_kernel(x_ref, w1_ref, b1_ref, w2_ref, b2_ref, w3_ref, b3_ref, o_ref):
    """Fused 3-layer MLP on one batch tile: relu(relu(x@W1+b1)@W2+b2)@W3+b3."""
    x = x_ref[...]                                       # (TB, IN_F=2)
    w1 = w1_ref[...]                                     # (IN_F, HPAD)

    # Layer 1 on the VPU: K=2, so two broadcast multiply-adds beat a tiny
    # MXU matmul (and avoid relayout of a 2-lane operand).
    h1 = b1_ref[...]                                     # (1, HPAD) -> broadcast
    for f in range(IN_F):                                # unrolled at trace time
        h1 = h1 + x[:, f:f + 1] * w1[f:f + 1, :]
    h1 = jnp.maximum(h1, 0.0)                            # (TB, HPAD)

    # Layers 2 and 3 on the MXU.
    h2 = jnp.dot(h1, w2_ref[...], preferred_element_type=jnp.float32) + b2_ref[...]
    h2 = jnp.maximum(h2, 0.0)                            # (TB, HPAD)
    out = jnp.dot(h2, w3_ref[...], preferred_element_type=jnp.float32) + b3_ref[...]
    o_ref[...] = out.astype(o_ref.dtype)                 # (TB, OUT_F=2)


def prepare_params(params):
    """Zero-pad weights/biases once; keep these as persistent device arrays."""
    w1, b1, w2, b2, w3, b3 = params
    w1p = jnp.zeros((IN_F, HPAD), jnp.float32).at[:, :HID].set(w1)
    b1p = jnp.zeros((1, HPAD), jnp.float32).at[0, :HID].set(b1)
    w2p = jnp.zeros((HPAD, HPAD), jnp.float32).at[:HID, :HID].set(w2)
    b2p = jnp.zeros((1, HPAD), jnp.float32).at[0, :HID].set(b2)
    w3p = jnp.zeros((HPAD, OUT_F), jnp.float32).at[:HID, :].set(w3)
    b3p = jnp.reshape(b3.astype(jnp.float32), (1, OUT_F))
    return tuple(jax.device_put(a) for a in (w1p, b1p, w2p, b2p, w3p, b3p))


@jax.jit
def classifer_forward(x, padded_params):
    """x: [batch, 2] float32 -> [batch, 2] float32 (matches PyTorch forward).

    NOTE: every distinct batch size triggers a recompile; in a serving setting
    bucket batch sizes (e.g. next power of two) before calling this.
    """
    w1p, b1p, w2p, b2p, w3p, b3p = padded_params
    batch = x.shape[0]

    tb = _choose_tile(batch)
    grid = pl.cdiv(batch, tb)

    return pl.pallas_call(
        _mlp_kernel,
        out_shape=jax.ShapeDtypeStruct((batch, OUT_F), jnp.float32),
        grid=(grid,),
        in_specs=[
            pl.BlockSpec((tb, IN_F), lambda i: (i, 0)),       # x tile (pipelined)
            pl.BlockSpec((IN_F, HPAD), lambda i: (0, 0)),     # w1 (resident)
            pl.BlockSpec((1, HPAD), lambda i: (0, 0)),        # b1
            pl.BlockSpec((HPAD, HPAD), lambda i: (0, 0)),     # w2
            pl.BlockSpec((1, HPAD), lambda i: (0, 0)),        # b2
            pl.BlockSpec((HPAD, OUT_F), lambda i: (0, 0)),    # w3
            pl.BlockSpec((1, OUT_F), lambda i: (0, 0)),       # b3
        ],
        out_specs=pl.BlockSpec((tb, OUT_F), lambda i: (i, 0)),
        compiler_params=pltpu.CompilerParams(
            dimension_semantics=("parallel",),        # megacore on v7x
            vmem_limit_bytes=32 * 1024 * 1024,        # explicit cap, v7x-safe
        ),
    )(x.astype(jnp.float32), w1p, b1p, w2p, b2p, w3p, b3p)


def init_params(key):
    """Deterministic init mimicking PyTorch Linear default (+/- 1/sqrt(fan_in)).

    Weights stored as [in_features, out_features] so forward is x @ W + b.
    """
    ks = jax.random.split(key, 6)

    def linear(kw, kb, fan_in, fan_out):
        bound = 1.0 / (fan_in ** 0.5)
        w = jax.random.uniform(kw, (fan_in, fan_out), jnp.float32, -bound, bound)
        b = jax.random.uniform(kb, (fan_out,), jnp.float32, -bound, bound)
        return w, b

    w1, b1 = linear(ks[0], ks[1], IN_F, HID)
    w2, b2 = linear(ks[2], ks[3], HID, HID)
    w3, b3 = linear(ks[4], ks[5], HID, OUT_F)
    return (w1, b1, w2, b2, w3, b3)


def _reference(x, params):
    w1, b1, w2, b2, w3, b3 = params
    h1 = jnp.maximum(x @ w1 + b1, 0.0)
    h2 = jnp.maximum(h1 @ w2 + b2, 0.0)
    return h2 @ w3 + b3


if __name__ == "__main__":
    key = jax.random.PRNGKey(0)
    k_param, k_x1, k_x2, k_x3 = jax.random.split(key, 4)

    params = init_params(k_param)
    padded_params = prepare_params(params)   # one-time padding, stays on device

    # Small batch (single grid step, batch < sublane tile).
    x_small = jax.random.normal(k_x1, (2, IN_F), jnp.float32)
    out_small = classifer_forward(x_small, padded_params)
    jax.block_until_ready(out_small)
    assert out_small.shape == (2, OUT_F)
    assert jnp.allclose(out_small, _reference(x_small, params), atol=1e-5, rtol=1e-5)

    # Ragged batch (not a multiple of the sublane / tile size).
    x_ragged = jax.random.normal(k_x2, (37, IN_F), jnp.float32)
    out_ragged = classifer_forward(x_ragged, padded_params)
    jax.block_until_ready(out_ragged)
    assert out_ragged.shape == (37, OUT_F)
    assert jnp.allclose(out_ragged, _reference(x_ragged, params), atol=1e-5, rtol=1e-5)

    # Larger batch exercising a bigger tile.
    x_big = jax.random.normal(k_x3, (1000, IN_F), jnp.float32)
    out_big = classifer_forward(x_big, padded_params)
    jax.block_until_ready(out_big)
    assert out_big.shape == (1000, OUT_F)
    assert jnp.allclose(out_big, _reference(x_big, params), atol=1e-5, rtol=1e-5)

    print("KERNEL_OK")
</pallas_src>

<mosaic_0001>
module attributes {stable_mosaic.version = 11 : i64} {
  func.func @_mlp_kernel(%arg0: i32, %arg1: memref<8x2xf32, #tpu.memory_space<vmem>>, %arg2: memref<2x128xf32, #tpu.memory_space<vmem>>, %arg3: memref<1x128xf32, #tpu.memory_space<vmem>>, %arg4: memref<128x128xf32, #tpu.memory_space<vmem>>, %arg5: memref<1x128xf32, #tpu.memory_space<vmem>>, %arg6: memref<128x2xf32, #tpu.memory_space<vmem>>, %arg7: memref<1x2xf32, #tpu.memory_space<vmem>>, %arg8: memref<8x2xf32, #tpu.memory_space<vmem>>) attributes {dimension_semantics = [#tpu.dimension_semantics<parallel>], iteration_bounds = array<i64: 1>, scalar_prefetch = 0 : i64, scratch_operands = 0 : i64, tpu.core_type = #tpu.core_type<tc>, window_params = [{transform_indices = @transform_0, window_bounds = array<i64: 8, 2>}, {pipeline_mode = #tpu.pipeline_mode<synchronous>, transform_indices = @transform_1, window_bounds = array<i64: 2, 128>}, {pipeline_mode = #tpu.pipeline_mode<synchronous>, transform_indices = @transform_2, window_bounds = array<i64: 1, 128>}, {pipeline_mode = #tpu.pipeline_mode<synchronous>, transform_indices = @transform_3, window_bounds = array<i64: 128, 128>}, {pipeline_mode = #tpu.pipeline_mode<synchronous>, transform_indices = @transform_4, window_bounds = array<i64: 1, 128>}, {pipeline_mode = #tpu.pipeline_mode<synchronous>, transform_indices = @transform_5, window_bounds = array<i64: 128, 2>}, {pipeline_mode = #tpu.pipeline_mode<synchronous>, transform_indices = @transform_6, window_bounds = array<i64: 1, 2>}, {transform_indices = @transform_7, window_bounds = array<i64: 8, 2>}]} {
    %c0 = arith.constant 0 : index
    %c0_0 = arith.constant 0 : index
    %0 = vector.load %arg1[%c0, %c0_0] : memref<8x2xf32, #tpu.memory_space<vmem>>, vector<8x2xf32>
    %c0_1 = arith.constant 0 : index
    %c0_2 = arith.constant 0 : index
    %1 = vector.load %arg2[%c0_1, %c0_2] : memref<2x128xf32, #tpu.memory_space<vmem>>, vector<2x128xf32>
    %c0_3 = arith.constant 0 : index
    %c0_4 = arith.constant 0 : index
    %2 = vector.load %arg3[%c0_3, %c0_4] : memref<1x128xf32, #tpu.memory_space<vmem>>, vector<1x128xf32>
    %3 = vector.extract_strided_slice %0 {offsets = [0, 0], sizes = [8, 1], strides = [1, 1]} : vector<8x2xf32> to vector<8x1xf32>
    %4 = vector.extract_strided_slice %1 {offsets = [0, 0], sizes = [1, 128], strides = [1, 1]} : vector<2x128xf32> to vector<1x128xf32>
    %5 = vector.broadcast %3 : vector<8x1xf32> to vector<8x128xf32>
    %6 = vector.broadcast %4 : vector<1x128xf32> to vector<8x128xf32>
    %7 = arith.mulf %5, %6 : vector<8x128xf32>
    %8 = vector.broadcast %2 : vector<1x128xf32> to vector<8x128xf32>
    %9 = arith.addf %8, %7 : vector<8x128xf32>
    %10 = vector.extract_strided_slice %0 {offsets = [0, 1], sizes = [8, 1], strides = [1, 1]} : vector<8x2xf32> to vector<8x1xf32>
    %11 = vector.extract_strided_slice %1 {offsets = [1, 0], sizes = [1, 128], strides = [1, 1]} : vector<2x128xf32> to vector<1x128xf32>
    %12 = vector.broadcast %10 : vector<8x1xf32> to vector<8x128xf32>
    %13 = vector.broadcast %11 : vector<1x128xf32> to vector<8x128xf32>
    %14 = arith.mulf %12, %13 : vector<8x128xf32>
    %15 = arith.addf %9, %14 : vector<8x128xf32>
    %cst = arith.constant 0.000000e+00 : f32
    %16 = vector.broadcast %cst : f32 to vector<8x128xf32>
    %17 = arith.maximumf %15, %16 : vector<8x128xf32>
    %c0_5 = arith.constant 0 : index
    %c0_6 = arith.constant 0 : index
    %18 = vector.load %arg4[%c0_5, %c0_6] : memref<128x128xf32, #tpu.memory_space<vmem>>, vector<128x128xf32>
    %cst_7 = arith.constant dense<0.000000e+00> : vector<8x128xf32>
    %19 = tpu.matmul %17, %18, %cst_7 {dimension_numbers = #tpu.dot_dimension_numbers<[1], [0], [0], [1], [0, 0, 1, 1], [], []>} : vector<8x128xf32>, vector<128x128xf32>, vector<8x128xf32> -> vector<8x128xf32>
    %c0_8 = arith.constant 0 : index
    %c0_9 = arith.constant 0 : index
    %20 = vector.load %arg5[%c0_8, %c0_9] : memref<1x128xf32, #tpu.memory_space<vmem>>, vector<1x128xf32>
    %21 = vector.broadcast %20 : vector<1x128xf32> to vector<8x128xf32>
    %22 = arith.addf %19, %21 : vector<8x128xf32>
    %cst_10 = arith.constant 0.000000e+00 : f32
    %23 = vector.broadcast %cst_10 : f32 to vector<8x128xf32>
    %24 = arith.maximumf %22, %23 : vector<8x128xf32>
    %c0_11 = arith.constant 0 : index
    %c0_12 = arith.constant 0 : index
    %25 = vector.load %arg6[%c0_11, %c0_12] : memref<128x2xf32, #tpu.memory_space<vmem>>, vector<128x2xf32>
    %cst_13 = arith.constant dense<0.000000e+00> : vector<8x2xf32>
    %26 = tpu.matmul %24, %25, %cst_13 {dimension_numbers = #tpu.dot_dimension_numbers<[1], [0], [0], [1], [0, 0, 1, 1], [], []>} : vector<8x128xf32>, vector<128x2xf32>, vector<8x2xf32> -> vector<8x2xf32>
    %c0_14 = arith.constant 0 : index
    %c0_15 = arith.constant 0 : index
    %27 = vector.load %arg7[%c0_14, %c0_15] : memref<1x2xf32, #tpu.memory_space<vmem>>, vector<1x2xf32>
    %28 = vector.broadcast %27 : vector<1x2xf32> to vector<8x2xf32>
    %29 = arith.addf %26, %28 : vector<8x2xf32>
    %c0_16 = arith.constant 0 : index
    %c0_17 = arith.constant 0 : index
    %30 = vector.load %arg8[%c0_16, %c0_17] : memref<8x2xf32, #tpu.memory_space<vmem>>, vector<8x2xf32>
    tpu.vector_store %arg8[%c0_16, %c0_17], %29 {strides = array<i32>} : memref<8x2xf32, #tpu.memory_space<vmem>>, vector<8x2xf32>,
    return
  }
  func.func @transform_0(%arg0: i32) -> (i32, i32) {
    %c0_i32 = arith.constant 0 : i32
    %c0_i32_0 = arith.constant 0 : i32
    return %arg0, %c0_i32 : i32, i32
  }
  func.func @transform_1(%arg0: i32) -> (i32, i32) {
    %c0_i32 = arith.constant 0 : i32
    %c0_i32_0 = arith.constant 0 : i32
    %c0_i32_1 = arith.constant 0 : i32
    return %c0_i32, %c0_i32_0 : i32, i32
  }
  func.func @transform_2(%arg0: i32) -> (i32, i32) {
    %c0_i32 = arith.constant 0 : i32
    %c0_i32_0 = arith.constant 0 : i32
    %c0_i32_1 = arith.constant 0 : i32
    return %c0_i32, %c0_i32_0 : i32, i32
  }
  func.func @transform_3(%arg0: i32) -> (i32, i32) {
    %c0_i32 = arith.constant 0 : i32
    %c0_i32_0 = arith.constant 0 : i32
    %c0_i32_1 = arith.constant 0 : i32
    return %c0_i32, %c0_i32_0 : i32, i32
  }
  func.func @transform_4(%arg0: i32) -> (i32, i32) {
    %c0_i32 = arith.constant 0 : i32
    %c0_i32_0 = arith.constant 0 : i32
    %c0_i32_1 = arith.constant 0 : i32
    return %c0_i32, %c0_i32_0 : i32, i32
  }
  func.func @transform_5(%arg0: i32) -> (i32, i32) {
    %c0_i32 = arith.constant 0 : i32
    %c0_i32_0 = arith.constant 0 : i32
    %c0_i32_1 = arith.constant 0 : i32
    return %c0_i32, %c0_i32_0 : i32, i32
  }
  func.func @transform_6(%arg0: i32) -> (i32, i32) {
    %c0_i32 = arith.constant 0 : i32
    %c0_i32_0 = arith.constant 0 : i32
    %c0_i32_1 = arith.constant 0 : i32
    return %c0_i32, %c0_i32_0 : i32, i32
  }
  func.func @transform_7(%arg0: i32) -> (i32, i32) {
    %c0_i32 = arith.constant 0 : i32
    %c0_i32_0 = arith.constant 0 : i32
    return %arg0, %c0_i32 : i32, i32
  }
}

</mosaic_0001>

<llo_original>
// kernel: classifer_forward.1
$region0: #{classifer_forward.1}
  #allocation0 [shape = 'u32[]', space=smem, size = 0x4, offset = 0x4, fixed_abs, tag = 'smem constant byte address 0x4 - core index']
  #allocation1 [shape = 'u32[144,128]{1,0:T(1,128)}', space=vmem, size = 0x12000, scoped, tag = 'internal scratch']
  %s0 = inlined_call_operand.vmem [shape: f32[2,2], index: 0, kind: input, shape index: {}]
  %s1 = inlined_call_operand.vmem [shape: f32[2,128], index: 1, kind: input, shape index: {}]
  %s2 = inlined_call_operand.vmem [shape: f32[1,128], index: 2, kind: input, shape index: {}]
  %s3 = inlined_call_operand.vmem [shape: f32[128,128], index: 3, kind: input, shape index: {}]
  %s4 = inlined_call_operand.vmem [shape: f32[1,128], index: 4, kind: input, shape index: {}]
  %s5 = inlined_call_operand.vmem [shape: f32[128,2], index: 5, kind: input, shape index: {}]
  %s6 = inlined_call_operand.vmem [shape: f32[1,2], index: 6, kind: input, shape index: {}]
  %s7 = inlined_call_operand.hbm [shape: f32[2,2], index: 7, kind: output, shape index: {}]
  %s8 = sld [smem:[#allocation0]]
  $region38: #{classifer_forward.1} parent=0
    _
  %s10 = ssub.s32 1, %s8
  %s11 = scalar_select 0, %s10, %s8
  $region1: #{classifer_forward.1} parent=0
    #allocation2 [shape = 'u8[4096]{0}', space=vmem, size = 0x1000, scoped, tag = 'output window, operand 0, single buffered']
    #allocation3 [shape = 's32[1]{0}', space=sflag, size = 0x4, scoped, tag = 'scoped memory for classifer_forward.1']
    %12 = vsyncpa [#allocation3], 0
    // Predicated region
    $region2: #{classifer_forward.1} parent=1 // pred_check
      _
    $region3: #{classifer_forward.1} parent=1 // pred_check_branch
      %14 = sbr.rel (0) target = $region5
    $region4: #{classifer_forward.1} parent=1 // pred_region
      _
    $region5: #{classifer_forward.1} parent=1 // pred_fallthru
      _
    // Predicated region
    $region6: #{classifer_forward.1} parent=1 // pred_check
      _
    $region7: #{classifer_forward.1} parent=1 // pred_check_branch
      %16 = sbr.rel (0) target = $region9
    $region8: #{classifer_forward.1} parent=1 // pred_region
      _
    $region9: #{classifer_forward.1} parent=1 // pred_fallthru
      _
    // Predicated region
    $region10: #{classifer_forward.1} parent=1 // pred_check
      _
    $region11: #{classifer_forward.1} parent=1 // pred_check_branch
      %18 = sbr.rel (0) target = $region13
    $region12: #{classifer_forward.1} parent=1 // pred_region
      _
    $region13: #{classifer_forward.1} parent=1 // pred_fallthru
      _
    // Predicated region
    $region14: #{classifer_forward.1} parent=1 // pred_check
      _
    $region15: #{classifer_forward.1} parent=1 // pred_check_branch
      %20 = sbr.rel (0) target = $region17
    $region16: #{classifer_forward.1} parent=1 // pred_region
      _
    $region17: #{classifer_forward.1} parent=1 // pred_fallthru
      _
    // Predicated region
    $region18: #{classifer_forward.1} parent=1 // pred_check
      _
    $region19: #{classifer_forward.1} parent=1 // pred_check_branch
      %22 = sbr.rel (0) target = $region21
    $region20: #{classifer_forward.1} parent=1 // pred_region
      _
    $region21: #{classifer_forward.1} parent=1 // pred_fallthru
      _
    // Predicated region
    $region22: #{classifer_forward.1} parent=1 // pred_check
      _
    $region23: #{classifer_forward.1} parent=1 // pred_check_branch
      %24 = sbr.rel (0) target = $region25
    $region24: #{classifer_forward.1} parent=1 // pred_region
      _
    $region25: #{classifer_forward.1} parent=1 // pred_fallthru
      _
    // Predicated region
    $region26: #{classifer_forward.1} parent=1 // pred_check
      _
    $region27: #{classifer_forward.1} parent=1 // pred_check_branch
      %26 = sbr.rel (0) target = $region29
    $region28: #{classifer_forward.1} parent=1 // pred_region
      _
    $region29: #{classifer_forward.1} parent=1 // pred_fallthru
      _
    %v27 = vld [vmem:[%s0] sm:$0xff]
    %v28 = vld [vmem:[%s1] sm:$0x3]
    %v29 = vld [vmem:[%s2] sm:$0x1]
    %31 = vset.pattern.permute.xlu0 0
    %32 = vperm.xlu0 %31, %v27
    %v33 = vpop.permute.xlu0 %32
    %v35 = vlaneseq
    %v36 = vshrl.u32 %v35, 7
    %v37 = vsub.s32 0, %v36
    %v38 = vrot.slane %v28, %v37
    %v39 = vmul.f32 %v33, %v38
    %v41 = vlaneseq
    %v42 = vshrl.u32 %v41, 7
    %v43 = vsub.s32 0, %v42
    %v44 = vrot.slane %v29, %v43
    %v46 = vadd.f32 %v44, %v39
    %47 = vset.pattern.permute.xlu0 1
    %48 = vperm.xlu0 %47, %v27
    %v49 = vpop.permute.xlu0 %48
    %v51 = vlaneseq
    %v52 = vshrl.u32 %v51, 7
    %v53 = vsub.s32 1, %v52
    %v54 = vrot.slane %v28, %v53
    %v55 = vmul.f32 %v49, %v54
    %v56 = vadd.f32 %v46, %v55
    %v57 = vmax.f32 %v56, 0.0
    %v58 = vld [vmem:[%s3] sm:$0xff]
    %v59 = vld [vmem:[%s3 + $0x8] sm:$0xff]
    %v60 = vld [vmem:[%s3 + $0x10] sm:$0xff]
    %v61 = vld [vmem:[%s3 + $0x18] sm:$0xff]
    %v62 = vld [vmem:[%s3 + $0x20] sm:$0xff]
    %v63 = vld [vmem:[%s3 + $0x28] sm:$0xff]
    %v64 = vld [vmem:[%s3 + $0x30] sm:$0xff]
    %v65 = vld [vmem:[%s3 + $0x38] sm:$0xff]
    %v66 = vld [vmem:[%s3 + $0x40] sm:$0xff]
    %v67 = vld [vmem:[%s3 + $0x48] sm:$0xff]
    %v68 = vld [vmem:[%s3 + $0x50] sm:$0xff]
    %v69 = vld [vmem:[%s3 + $0x58] sm:$0xff]
    %v70 = vld [vmem:[%s3 + $0x60] sm:$0xff]
    %v71 = vld [vmem:[%s3 + $0x68] sm:$0xff]
    %v72 = vld [vmem:[%s3 + $0x70] sm:$0xff]
    %v73 = vld [vmem:[%s3 + $0x78] sm:$0xff]
    %v74 = vld [vmem:[%s4] sm:$0x1]
    %v76 = vlaneseq
    %v77 = vshrl.u32 %v76, 7
    %v78 = vsub.s32 0, %v77
    %v79 = vrot.slane %v74, %v78
    %81 = vmatprep.subr.mxu0 0.0
    %82 = vmatpush1.msra.mxu0 %v58
    %83 = vmatprep.subr.mxu0 0.0
    %84 = vmatpush1.msra.mxu0 %v59
    %85 = vmatprep.subr.mxu0 0.0
    %86 = vmatpush1.msra.mxu0 %v60
    %87 = vmatprep.subr.mxu0 0.0
    %88 = vmatpush1.msra.mxu0 %v61
    %89 = vmatprep.subr.mxu0 0.0
    %90 = vmatpush1.msra.mxu0 %v62
    %91 = vmatprep.subr.mxu0 0.0
    %92 = vmatpush1.msra.mxu0 %v63
    %93 = vmatprep.subr.mxu0 0.0
    %94 = vmatpush1.msra.mxu0 %v64
    %95 = vmatprep.subr.mxu0 0.0
    %96 = vmatpush1.msra.mxu0 %v65
    %97 = vmatprep.subr.mxu0 0.0
    %98 = vmatpush1.msra.mxu0 %v66
    %99 = vmatprep.subr.mxu0 0.0
    %100 = vmatpush1.msra.mxu0 %v67
    %101 = vmatprep.subr.mxu0 0.0
    %102 = vmatpush1.msra.mxu0 %v68
    %103 = vmatprep.subr.mxu0 0.0
    %104 = vmatpush1.msra.mxu0 %v69
    %105 = vmatprep.subr.mxu0 0.0
    %106 = vmatpush1.msra.mxu0 %v70
    %107 = vmatprep.subr.mxu0 0.0
    %108 = vmatpush1.msra.mxu0 %v71
    %109 = vmatprep.subr.mxu0 0.0
    %110 = vmatpush1.msra.mxu0 %v72
    %111 = vmatprep.subr.mxu0 0.0
    %112 = vmatpush1.msra.mxu0 %v73
    %113 = vmatprep.subr.mxu0 0.0
    %114 = vmatpush1.msra.mxu0 0.0
    %115 = vmatprep.subr.mxu0 0.0
    %116 = vmatpush1.msra.mxu0 0.0
    %117 = vmatprep.subr.mxu0 0.0
    %118 = vmatpush1.msra.mxu0 0.0
    %119 = vmatprep.subr.mxu0 0.0
    %120 = vmatpush1.msra.mxu0 0.0
    %121 = vmatprep.subr.mxu0 0.0
    %122 = vmatpush1.msra.mxu0 0.0
    %123 = vmatprep.subr.mxu0 0.0
    %124 = vmatpush1.msra.mxu0 0.0
    %125 = vmatprep.subr.mxu0 0.0
    %126 = vmatpush1.msra.mxu0 0.0
    %127 = vmatprep.subr.mxu0 0.0
    %128 = vmatpush1.msra.mxu0 0.0
    %129 = vmatprep.subr.mxu0 0.0
    %130 = vmatpush1.msra.mxu0 0.0
    %131 = vmatprep.subr.mxu0 0.0
    %132 = vmatpush1.msra.mxu0 0.0
    %133 = vmatprep.subr.mxu0 0.0
    %134 = vmatpush1.msra.mxu0 0.0
    %135 = vmatprep.subr.mxu0 0.0
    %136 = vmatpush1.msra.mxu0 0.0
    %137 = vmatprep.subr.mxu0 0.0
    %138 = vmatpush1.msra.mxu0 0.0
    %139 = vmatprep.subr.mxu0 0.0
    %140 = vmatpush1.msra.mxu0 0.0
    %141 = vmatprep.subr.mxu0 0.0
    %142 = vmatpush1.msra.mxu0 0.0
    %143 = vmatprep.subr.mxu0 0.0
    %144 = vmatpush1.msra.mxu0 0.0
    %145 = vmatprep.mubr.f32.mxu0 0.0
    %146 = vmatmul.mubr.f32.gmra.mrb[0].mxu0 %v57
    %v147 = vpop.f32.mrb[0].mxu0
    %v148 = vadd.f32 %v79, %v147
    %v149 = vpop.f32.mrb[0].mxu0
    %150 = vdwg.mxu0
    %v151 = vmax.f32 %v148, 0.0
    %v152 = vld [vmem:[%s5] sm:$0xff]
    %v153 = vld [vmem:[%s5 + $0x8] sm:$0xff]
    %v154 = vld [vmem:[%s5 + $0x10] sm:$0xff]
    %v155 = vld [vmem:[%s5 + $0x18] sm:$0xff]
    %v156 = vld [vmem:[%s5 + $0x20] sm:$0xff]
    %v157 = vld [vmem:[%s5 + $0x28] sm:$0xff]
    %v158 = vld [vmem:[%s5 + $0x30] sm:$0xff]
    %v159 = vld [vmem:[%s5 + $0x38] sm:$0xff]
    %v160 = vld [vmem:[%s5 + $0x40] sm:$0xff]
    %v161 = vld [vmem:[%s5 + $0x48] sm:$0xff]
    %v162 = vld [vmem:[%s5 + $0x50] sm:$0xff]
    %v163 = vld [vmem:[%s5 + $0x58] sm:$0xff]
    %v164 = vld [vmem:[%s5 + $0x60] sm:$0xff]
    %v165 = vld [vmem:[%s5 + $0x68] sm:$0xff]
    %v166 = vld [vmem:[%s5 + $0x70] sm:$0xff]
    %v167 = vld [vmem:[%s5 + $0x78] sm:$0xff]
    %v168 = vld [vmem:[%s6] sm:$0x1]
    %v170 = vlaneseq
    %v171 = vshrl.u32 %v170, 7
    %v172 = vsub.s32 0, %v171
    %v173 = vrot.slane %v168, %v172
    %175 = vmatprep.subr.mxu0 0.0
    %176 = vmatpush1.msra.mxu0 %v152
    %177 = vmatprep.subr.mxu0 0.0
    %178 = vmatpush1.msra.mxu0 %v153
    %179 = vmatprep.subr.mxu0 0.0
    %180 = vmatpush1.msra.mxu0 %v154
    %181 = vmatprep.subr.mxu0 0.0
    %182 = vmatpush1.msra.mxu0 %v155
    %183 = vmatprep.subr.mxu0 0.0
    %184 = vmatpush1.msra.mxu0 %v156
    %185 = vmatprep.subr.mxu0 0.0
    %186 = vmatpush1.msra.mxu0 %v157
    %187 = vmatprep.subr.mxu0 0.0
    %188 = vmatpush1.msra.mxu0 %v158
    %189 = vmatprep.subr.mxu0 0.0
    %190 = vmatpush1.msra.mxu0 %v159
    %191 = vmatprep.subr.mxu0 0.0
    %192 = vmatpush1.msra.mxu0 %v160
    %193 = vmatprep.subr.mxu0 0.0
    %194 = vmatpush1.msra.mxu0 %v161
    %195 = vmatprep.subr.mxu0 0.0
    %196 = vmatpush1.msra.mxu0 %v162
    %197 = vmatprep.subr.mxu0 0.0
    %198 = vmatpush1.msra.mxu0 %v163
    %199 = vmatprep.subr.mxu0 0.0
    %200 = vmatpush1.msra.mxu0 %v164
    %201 = vmatprep.subr.mxu0 0.0
    %202 = vmatpush1.msra.mxu0 %v165
    %203 = vmatprep.subr.mxu0 0.0
    %204 = vmatpush1.msra.mxu0 %v166
    %205 = vmatprep.subr.mxu0 0.0
    %206 = vmatpush1.msra.mxu0 %v167
    %207 = vmatprep.subr.mxu0 0.0
    %208 = vmatpush1.msra.mxu0 0.0
    %209 = vmatprep.subr.mxu0 0.0
    %210 = vmatpush1.msra.mxu0 0.0
    %211 = vmatprep.subr.mxu0 0.0
    %212 = vmatpush1.msra.mxu0 0.0
    %213 = vmatprep.subr.mxu0 0.0
    %214 = vmatpush1.msra.mxu0 0.0
    %215 = vmatprep.subr.mxu0 0.0
    %216 = vmatpush1.msra.mxu0 0.0
    %217 = vmatprep.subr.mxu0 0.0
    %218 = vmatpush1.msra.mxu0 0.0
    %219 = vmatprep.subr.mxu0 0.0
    %220 = vmatpush1.msra.mxu0 0.0
    %221 = vmatprep.subr.mxu0 0.0
    %222 = vmatpush1.msra.mxu0 0.0
    %223 = vmatprep.subr.mxu0 0.0
    %224 = vmatpush1.msra.mxu0 0.0
    %225 = vmatprep.subr.mxu0 0.0
    %226 = vmatpush1.msra.mxu0 0.0
    %227 = vmatprep.subr.mxu0 0.0
    %228 = vmatpush1.msra.mxu0 0.0
    %229 = vmatprep.subr.mxu0 0.0
    %230 = vmatpush1.msra.mxu0 0.0
    %231 = vmatprep.subr.mxu0 0.0
    %232 = vmatpush1.msra.mxu0 0.0
    %233 = vmatprep.subr.mxu0 0.0
    %234 = vmatpush1.msra.mxu0 0.0
    %235 = vmatprep.subr.mxu0 0.0
    %236 = vmatpush1.msra.mxu0 0.0
    %237 = vmatprep.subr.mxu0 0.0
    %238 = vmatpush1.msra.mxu0 0.0
    %239 = vmatprep.mubr.f32.mxu0 0.0
    %240 = vmatmul.mubr.f32.gmra.mrb[0].mxu0 %v151
    %v241 = vpop.f32.mrb[0].mxu0
    %v242 = vadd.f32 %v173, %v241
    %v243 = vpop.f32.mrb[0].mxu0
    %244 = vdwg.mxu0
    %vm245 = vcmask 15360
    %246 = vst.msk [vmem:[#allocation2] sm:$0xff] %vm245, %v242
    // Predicated region
    $region30: #{classifer_forward.1} parent=1 // pred_check
      _
    $region31: #{classifer_forward.1} parent=1 // pred_check_branch
      %248 = sbr.rel (0) target = $region33
    $region32: #{classifer_forward.1} parent=1 // pred_region
      %s250 = ssub.s32 128, 32
      %251 = vsyncadd [#allocation3], %s250
      %s252 = sshll.u32 [#allocation2], 4
      %s253 = int_to_ptr.vmem [resolvable:$true] %s252
      %258 = dma.vmem_to_hbm [thread:$0]  %s253, 32, %s7, [#allocation3], 32, 32, 2
    $region33: #{classifer_forward.1} parent=1 // pred_fallthru
      _
    // Predicated region
    $region34: #{classifer_forward.1} parent=1 // pred_check
      _
    $region35: #{classifer_forward.1} parent=1 // pred_check_branch
      %260 = sbr.rel (0) target = $region37
    $region36: #{classifer_forward.1} parent=1 // pred_region
      %261 = dma.done [#allocation3], 128
    $region37: #{classifer_forward.1} parent=1 // pred_fallthru
      _
    %262 = vsyncpa [#allocation3], 1

</llo_original>
